<compile_context>
chip_gen: v7x
topology: tpu7x:2x2x1
jax: 0.10.0
libtpu: 0.0.40
codegen_flags: <defaults>
</compile_context>

<pallas_src>
import jax
import jax.numpy as jnp
from jax import lax
from jax.experimental import pallas as pl
from jax.experimental.pallas import tpu as pltpu

EPS = 1e-5
LANE = 128


def _round_up(x, m):
    return (x + m - 1) // m * m


def _fold_bn(gamma, beta, mean, var):
    scale = gamma / jnp.sqrt(var + EPS)
    bias = beta - mean * scale
    return scale, bias


# ----------------------------- Pallas kernel --------------------------------
def _make_conv_kernel(K, t_rows, wo, cins, cpad):
    """Stride-1 VALID KxK conv (+bias+ReLU) over `len(cins)` input feature maps.

    Refs: x_0..x_{n-1}  : (1, t_rows+K-1, wo+K-1, cins[t])   row block w/ halo
          w_0..w_{n-1}  : (K*K, cins[t], cpad)               scale-folded
          b             : (1, cpad)
          o             : (1, t_rows, wo, cpad)
    """
    n_in = len(cins)
    m = t_rows * wo

    def kernel(*refs):
        x_refs = refs[:n_in]
        w_refs = refs[n_in:2 * n_in]
        b_ref = refs[2 * n_in]
        o_ref = refs[2 * n_in + 1]

        acc = jnp.zeros((m, cpad), jnp.float32)
        for t in range(n_in):
            cin = cins[t]
            for kh in range(K):
                for kw in range(K):
                    patch = x_refs[t][pl.ds(0, 1),
                                      pl.ds(kh, t_rows),
                                      pl.ds(kw, wo), :]
                    patch = patch.reshape(m, cin)
                    wk = w_refs[t][kh * K + kw]            # (cin, cpad)
                    acc = acc + jnp.dot(patch, wk,
                                        preferred_element_type=jnp.float32)
        y = jnp.maximum(acc + b_ref[...], 0.0)             # f32 epilogue
        o_ref[...] = y.reshape(1, t_rows, wo, cpad)

    return kernel


def _conv_block_call(x_blocks, w_slabs, bias_pad, K, t_rows, wo, compute_dtype):
    """Run the row-blocked conv kernel.  x_blocks[t]: (NB, t_rows+K-1, win_t, cin_t)."""
    nb = x_blocks[0].shape[0]
    cpad = w_slabs[0].shape[-1]
    cins = tuple(int(x.shape[-1]) for x in x_blocks)

    x_blocks = [x.astype(compute_dtype) for x in x_blocks]
    w_slabs = [w.astype(compute_dtype) for w in w_slabs]
    bias_pad = bias_pad.reshape(1, cpad).astype(jnp.float32)

    in_specs = (
        [pl.BlockSpec((1,) + tuple(x.shape[1:]), lambda i: (i, 0, 0, 0))
         for x in x_blocks]
        + [pl.BlockSpec(tuple(w.shape), lambda i: (0, 0, 0)) for w in w_slabs]
        + [pl.BlockSpec((1, cpad), lambda i: (0, 0))]
    )
    out_specs = pl.BlockSpec((1, t_rows, wo, cpad), lambda i: (i, 0, 0, 0))

    flops = 2 * nb * t_rows * wo * cpad * sum(K * K * c for c in cins)
    bytes_accessed = (sum(x.size * x.dtype.itemsize for x in x_blocks)
                      + sum(w.size * w.dtype.itemsize for w in w_slabs)
                      + bias_pad.size * 4 + nb * t_rows * wo * cpad * 4)

    return pl.pallas_call(
        _make_conv_kernel(K, t_rows, wo, cins, cpad),
        out_shape=jax.ShapeDtypeStruct((nb, t_rows, wo, cpad), jnp.float32),
        grid=(nb,),
        in_specs=in_specs,
        out_specs=out_specs,
        compiler_params=pltpu.CompilerParams(
            dimension_semantics=("parallel",)),
        cost_estimate=pl.CostEstimate(flops=flops, transcendentals=0,
                                      bytes_accessed=bytes_accessed),
    )(*x_blocks, *w_slabs, bias_pad)


# ------------------------------- JAX glue ------------------------------------
def _pick_row_tile(ho, wo):
    # Target ~512 output rows of the implicit (M, K) matmul per grid step.
    return max(1, min(ho, pl.cdiv(512, max(wo, 1))))


def _row_blocks(x, K, t_rows, n_blocks):
    """x: (N, Hin, Win, C) input of a VALID KxK stride-1 conv ->
    (N*n_blocks, t_rows+K-1, Win, C) row blocks with K-1 halo rows."""
    n, hin, win, c = x.shape
    need = n_blocks * t_rows + K - 1
    if need > hin:
        x = jnp.pad(x, ((0, 0), (0, need - hin), (0, 0), (0, 0)))
    rows = t_rows + K - 1
    blocks = [lax.slice_in_dim(x, i * t_rows, i * t_rows + rows, axis=1)
              for i in range(n_blocks)]
    xb = jnp.stack(blocks, axis=1)                # (N, n_blocks, rows, Win, C)
    return xb.reshape(n * n_blocks, rows, win, c)


def conv1_s2_pallas(x_nhwc, w1, bn1, cpad, compute_dtype):
    """3x3 stride-2 pad-1 conv + folded BN + ReLU; returns (N, Ho, Wo, cpad)."""
    n, h, w_, cin = x_nhwc.shape
    assert h % 2 == 0 and w_ % 2 == 0, "Conv2x expects even spatial dims"
    ho, wo = h // 2, w_ // 2
    cout = w1.shape[-1]
    scale, bias = _fold_bn(*bn1)

    # spatial pad 1, then space-to-depth (2x2 phases): stride-2 3x3 conv
    # becomes a stride-1 VALID 2x2 conv over 4*Cin phase channels.
    xp = jnp.pad(x_nhwc, ((0, 0), (1, 1), (1, 1), (0, 0)))
    z = xp.reshape(n, ho + 1, 2, wo + 1, 2, cin)
    z = z.transpose(0, 1, 3, 2, 4, 5).reshape(n, ho + 1, wo + 1, 4 * cin)

    # scatter the 3x3 weights into 2x2 phase weights, fold BN scale, pad lanes.
    wf = w1 * scale[None, None, None, :]
    w2 = jnp.zeros((2, 2, 2, 2, cin, cout), wf.dtype)
    for kh in range(3):
        for kw in range(3):
            w2 = w2.at[kh // 2, kw // 2, kh % 2, kw % 2].set(wf[kh, kw])
    w2 = w2.reshape(4, 4 * cin, cout)
    w2 = jnp.pad(w2, ((0, 0), (0, 0), (0, cpad - cout)))
    bias_p = jnp.pad(bias, (0, cpad - cout))

    t_rows = _pick_row_tile(ho, wo)
    n_blocks = pl.cdiv(ho, t_rows)
    xb = _row_blocks(z, 2, t_rows, n_blocks)
    out = _conv_block_call([xb], [w2], bias_p, 2, t_rows, wo, compute_dtype)
    out = out.reshape(n, n_blocks * t_rows, wo, cpad)[:, :ho]
    return out            # channels >= cout are exactly zero


def conv2_fused_concat_pallas(y_padc, rem, w2, bn2, cpad, compute_dtype):
    """3x3 stride-1 pad-1 conv over concat([y, rem]) without materializing
    the concat: two input slabs, two weight slabs, one accumulator."""
    n, ho, wo, _ = y_padc.shape
    cout = w2.shape[-1]
    scale, bias = _fold_bn(*bn2)

    wf = w2 * scale[None, None, None, :]              # (3,3,2*cout,cout)
    wa = wf[:, :, :cout, :]                           # applies to conv1 output
    wb = wf[:, :, cout:, :]                           # applies to rem
    wa = jnp.pad(wa, ((0, 0), (0, 0), (0, cpad - cout), (0, cpad - cout)))
    wb = jnp.pad(wb, ((0, 0), (0, 0), (0, 0), (0, cpad - cout)))
    wa = wa.reshape(9, cpad, cpad)
    wb = wb.reshape(9, cout, cpad)
    bias_p = jnp.pad(bias, (0, cpad - cout))

    yp = jnp.pad(y_padc, ((0, 0), (1, 1), (1, 1), (0, 0)))
    rp = jnp.pad(rem, ((0, 0), (1, 1), (1, 1), (0, 0)))

    t_rows = _pick_row_tile(ho, wo)
    n_blocks = pl.cdiv(ho, t_rows)
    yb = _row_blocks(yp, 3, t_rows, n_blocks)
    rb = _row_blocks(rp, 3, t_rows, n_blocks)
    out = _conv_block_call([yb, rb], [wa, wb], bias_p, 3, t_rows, wo,
                           compute_dtype)
    out = out.reshape(n, n_blocks * t_rows, wo, cpad)[:, :ho, :, :cout]
    return out


def conv2x_forward(x_nchw, rem_nchw, params, compute_dtype=jnp.float32):
    """Conv2x.forward (deconv=False, is_3d=False, concat=True).
    compute_dtype=jnp.bfloat16 halves HBM/VMEM traffic on v6e/v7x (f32 acc)."""
    x = jnp.transpose(x_nchw, (0, 2, 3, 1)).astype(jnp.float32)      # NHWC
    rem = jnp.transpose(rem_nchw, (0, 2, 3, 1)).astype(jnp.float32)  # NHWC
    cout = params["w1"].shape[-1]
    cpad = _round_up(cout, LANE)

    y = conv1_s2_pallas(x, params["w1"], params["bn1"], cpad, compute_dtype)
    # PyTorch: assert x.size() == rem.size()
    assert y.shape[:3] == rem.shape[:3] and rem.shape[-1] == cout
    out = conv2_fused_concat_pallas(y, rem, params["w2"], params["bn2"],
                                    cpad, compute_dtype)
    return jnp.transpose(out, (0, 3, 1, 2))                          # NCHW


# ------------------------------ reference ------------------------------------
def _ref_basic_conv(x_nhwc, w_hwio, bn_params, stride, pad):
    dn = lax.conv_dimension_numbers(x_nhwc.shape, w_hwio.shape,
                                    ("NHWC", "HWIO", "NHWC"))
    y = lax.conv_general_dilated(x_nhwc, w_hwio, (stride, stride),
                                 ((pad, pad), (pad, pad)),
                                 dimension_numbers=dn)
    scale, bias = _fold_bn(*bn_params)
    return jnp.maximum(y * scale + bias, 0.0)


def conv2x_reference(x_nchw, rem_nchw, params):
    x = jnp.transpose(x_nchw, (0, 2, 3, 1)).astype(jnp.float32)
    rem = jnp.transpose(rem_nchw, (0, 2, 3, 1)).astype(jnp.float32)
    y = _ref_basic_conv(x, params["w1"], params["bn1"], 2, 1)
    y = jnp.concatenate([y, rem], axis=-1)
    y = _ref_basic_conv(y, params["w2"], params["bn2"], 1, 1)
    return jnp.transpose(y, (0, 3, 1, 2))


# ------------------------------- params --------------------------------------
def init_params(key, in_channels, out_channels):
    ks = jax.random.split(key, 10)
    w1 = 0.1 * jax.random.normal(ks[0], (3, 3, in_channels, out_channels),
                                 jnp.float32)
    w2 = 0.1 * jax.random.normal(ks[1], (3, 3, 2 * out_channels, out_channels),
                                 jnp.float32)
    bn1 = (1.0 + 0.1 * jax.random.normal(ks[2], (out_channels,), jnp.float32),
           0.1 * jax.random.normal(ks[3], (out_channels,), jnp.float32),
           0.05 * jax.random.normal(ks[4], (out_channels,), jnp.float32),
           0.5 + jax.random.uniform(ks[5], (out_channels,), jnp.float32))
    bn2 = (1.0 + 0.1 * jax.random.normal(ks[6], (out_channels,), jnp.float32),
           0.1 * jax.random.normal(ks[7], (out_channels,), jnp.float32),
           0.05 * jax.random.normal(ks[8], (out_channels,), jnp.float32),
           0.5 + jax.random.uniform(ks[9], (out_channels,), jnp.float32))
    return {"w1": w1, "w2": w2, "bn1": bn1, "bn2": bn2}


# --------------------------------- main ---------------------------------------
if __name__ == "__main__":
    key = jax.random.PRNGKey(0)
    k_x, k_rem, k_p = jax.random.split(key, 3)

    N, Cin, H, W = 2, 4, 16, 16
    Cout = 8
    x = jax.random.normal(k_x, (N, Cin, H, W), jnp.float32)              # NCHW
    rem = jax.random.normal(k_rem, (N, Cout, H // 2, W // 2), jnp.float32)

    params = init_params(k_p, Cin, Cout)

    out = jax.block_until_ready(conv2x_forward(x, rem, params))
    assert out.shape == (N, Cout, H // 2, W // 2), out.shape

    ref = jax.block_until_ready(conv2x_reference(x, rem, params))
    assert jnp.allclose(out, ref, rtol=1e-4, atol=1e-4), \
        float(jnp.max(jnp.abs(out - ref)))

    print("KERNEL_OK")
</pallas_src>

<mosaic_0001>
module attributes {stable_mosaic.version = 11 : i64} {
  func.func @kernel(%arg0: i32, %arg1: memref<1x9x9x16xf32, #tpu.memory_space<vmem>>, %arg2: memref<4x16x128xf32, #tpu.memory_space<vmem>>, %arg3: memref<1x128xf32, #tpu.memory_space<vmem>>, %arg4: memref<1x8x8x128xf32, #tpu.memory_space<vmem>>) attributes {dimension_semantics = [#tpu.dimension_semantics<parallel>], iteration_bounds = array<i64: 2>, scalar_prefetch = 0 : i64, scratch_operands = 0 : i64, tpu.core_type = #tpu.core_type<tc>, window_params = [{transform_indices = @transform_0, window_bounds = array<i64: 1, 9, 9, 16>}, {pipeline_mode = #tpu.pipeline_mode<synchronous>, transform_indices = @transform_1, window_bounds = array<i64: 4, 16, 128>}, {pipeline_mode = #tpu.pipeline_mode<synchronous>, transform_indices = @transform_2, window_bounds = array<i64: 1, 128>}, {transform_indices = @transform_3, window_bounds = array<i64: 1, 8, 8, 128>}]} {
    %cst = arith.constant 0.000000e+00 : f32
    %0 = vector.broadcast %cst : f32 to vector<64x128xf32>
    %c0 = arith.constant 0 : index
    %c0_0 = arith.constant 0 : index
    %c0_1 = arith.constant 0 : index
    %c0_2 = arith.constant 0 : index
    %1 = vector.load %arg1[%c0, %c0_0, %c0_1, %c0_2] : memref<1x9x9x16xf32, #tpu.memory_space<vmem>>, vector<1x8x8x16xf32>
    %2 = vector.shape_cast %1 : vector<1x8x8x16xf32> to vector<64x16xf32>
    %c0_3 = arith.constant 0 : index
    %c0_4 = arith.constant 0 : index
    %c0_5 = arith.constant 0 : index
    %3 = vector.load %arg2[%c0_3, %c0_4, %c0_5] : memref<4x16x128xf32, #tpu.memory_space<vmem>>, vector<1x16x128xf32>
    %4 = vector.shape_cast %3 : vector<1x16x128xf32> to vector<16x128xf32>
    %cst_6 = arith.constant dense<0.000000e+00> : vector<64x128xf32>
    %5 = tpu.matmul %2, %4, %cst_6 {dimension_numbers = #tpu.dot_dimension_numbers<[1], [0], [0], [1], [0, 0, 1, 1], [], []>} : vector<64x16xf32>, vector<16x128xf32>, vector<64x128xf32> -> vector<64x128xf32>
    %6 = arith.addf %0, %5 : vector<64x128xf32>
    %c0_7 = arith.constant 0 : index
    %c0_8 = arith.constant 0 : index
    %c1 = arith.constant 1 : index
    %c0_9 = arith.constant 0 : index
    %7 = vector.load %arg1[%c0_7, %c0_8, %c1, %c0_9] : memref<1x9x9x16xf32, #tpu.memory_space<vmem>>, vector<1x8x8x16xf32>
    %8 = vector.shape_cast %7 : vector<1x8x8x16xf32> to vector<64x16xf32>
    %c1_10 = arith.constant 1 : index
    %c0_11 = arith.constant 0 : index
    %c0_12 = arith.constant 0 : index
    %9 = vector.load %arg2[%c1_10, %c0_11, %c0_12] : memref<4x16x128xf32, #tpu.memory_space<vmem>>, vector<1x16x128xf32>
    %10 = vector.shape_cast %9 : vector<1x16x128xf32> to vector<16x128xf32>
    %cst_13 = arith.constant dense<0.000000e+00> : vector<64x128xf32>
    %11 = tpu.matmul %8, %10, %cst_13 {dimension_numbers = #tpu.dot_dimension_numbers<[1], [0], [0], [1], [0, 0, 1, 1], [], []>} : vector<64x16xf32>, vector<16x128xf32>, vector<64x128xf32> -> vector<64x128xf32>
    %12 = arith.addf %6, %11 : vector<64x128xf32>
    %c0_14 = arith.constant 0 : index
    %c1_15 = arith.constant 1 : index
    %c0_16 = arith.constant 0 : index
    %c0_17 = arith.constant 0 : index
    %13 = vector.load %arg1[%c0_14, %c1_15, %c0_16, %c0_17] : memref<1x9x9x16xf32, #tpu.memory_space<vmem>>, vector<1x8x8x16xf32>
    %14 = vector.shape_cast %13 : vector<1x8x8x16xf32> to vector<64x16xf32>
    %c2 = arith.constant 2 : index
    %c0_18 = arith.constant 0 : index
    %c0_19 = arith.constant 0 : index
    %15 = vector.load %arg2[%c2, %c0_18, %c0_19] : memref<4x16x128xf32, #tpu.memory_space<vmem>>, vector<1x16x128xf32>
    %16 = vector.shape_cast %15 : vector<1x16x128xf32> to vector<16x128xf32>
    %cst_20 = arith.constant dense<0.000000e+00> : vector<64x128xf32>
    %17 = tpu.matmul %14, %16, %cst_20 {dimension_numbers = #tpu.dot_dimension_numbers<[1], [0], [0], [1], [0, 0, 1, 1], [], []>} : vector<64x16xf32>, vector<16x128xf32>, vector<64x128xf32> -> vector<64x128xf32>
    %18 = arith.addf %12, %17 : vector<64x128xf32>
    %c0_21 = arith.constant 0 : index
    %c1_22 = arith.constant 1 : index
    %c1_23 = arith.constant 1 : index
    %c0_24 = arith.constant 0 : index
    %19 = vector.load %arg1[%c0_21, %c1_22, %c1_23, %c0_24] : memref<1x9x9x16xf32, #tpu.memory_space<vmem>>, vector<1x8x8x16xf32>
    %20 = vector.shape_cast %19 : vector<1x8x8x16xf32> to vector<64x16xf32>
    %c3 = arith.constant 3 : index
    %c0_25 = arith.constant 0 : index
    %c0_26 = arith.constant 0 : index
    %21 = vector.load %arg2[%c3, %c0_25, %c0_26] : memref<4x16x128xf32, #tpu.memory_space<vmem>>, vector<1x16x128xf32>
    %22 = vector.shape_cast %21 : vector<1x16x128xf32> to vector<16x128xf32>
    %cst_27 = arith.constant dense<0.000000e+00> : vector<64x128xf32>
    %23 = tpu.matmul %20, %22, %cst_27 {dimension_numbers = #tpu.dot_dimension_numbers<[1], [0], [0], [1], [0, 0, 1, 1], [], []>} : vector<64x16xf32>, vector<16x128xf32>, vector<64x128xf32> -> vector<64x128xf32>
    %24 = arith.addf %18, %23 : vector<64x128xf32>
    %c0_28 = arith.constant 0 : index
    %c0_29 = arith.constant 0 : index
    %25 = vector.load %arg3[%c0_28, %c0_29] : memref<1x128xf32, #tpu.memory_space<vmem>>, vector<1x128xf32>
    %26 = vector.broadcast %25 : vector<1x128xf32> to vector<64x128xf32>
    %27 = arith.addf %24, %26 : vector<64x128xf32>
    %cst_30 = arith.constant 0.000000e+00 : f32
    %28 = vector.broadcast %cst_30 : f32 to vector<64x128xf32>
    %29 = arith.maximumf %27, %28 : vector<64x128xf32>
    %30 = vector.shape_cast %29 : vector<64x128xf32> to vector<1x8x8x128xf32>
    %c0_31 = arith.constant 0 : index
    %c0_32 = arith.constant 0 : index
    %c0_33 = arith.constant 0 : index
    %c0_34 = arith.constant 0 : index
    %31 = vector.load %arg4[%c0_31, %c0_32, %c0_33, %c0_34] : memref<1x8x8x128xf32, #tpu.memory_space<vmem>>, vector<1x8x8x128xf32>
    tpu.vector_store %arg4[%c0_31, %c0_32, %c0_33, %c0_34], %30 {strides = array<i32>} : memref<1x8x8x128xf32, #tpu.memory_space<vmem>>, vector<1x8x8x128xf32>,
    return
  }
  func.func @transform_0(%arg0: i32) -> (i32, i32, i32, i32) {
    %c0_i32 = arith.constant 0 : i32
    %c0_i32_0 = arith.constant 0 : i32
    %c0_i32_1 = arith.constant 0 : i32
    %c0_i32_2 = arith.constant 0 : i32
    return %arg0, %c0_i32, %c0_i32_0, %c0_i32_1 : i32, i32, i32, i32
  }
  func.func @transform_1(%arg0: i32) -> (i32, i32, i32) {
    %c0_i32 = arith.constant 0 : i32
    %c0_i32_0 = arith.constant 0 : i32
    %c0_i32_1 = arith.constant 0 : i32
    %c0_i32_2 = arith.constant 0 : i32
    return %c0_i32, %c0_i32_0, %c0_i32_1 : i32, i32, i32
  }
  func.func @transform_2(%arg0: i32) -> (i32, i32) {
    %c0_i32 = arith.constant 0 : i32
    %c0_i32_0 = arith.constant 0 : i32
    %c0_i32_1 = arith.constant 0 : i32
    return %c0_i32, %c0_i32_0 : i32, i32
  }
  func.func @transform_3(%arg0: i32) -> (i32, i32, i32, i32) {
    %c0_i32 = arith.constant 0 : i32
    %c0_i32_0 = arith.constant 0 : i32
    %c0_i32_1 = arith.constant 0 : i32
    %c0_i32_2 = arith.constant 0 : i32
    return %arg0, %c0_i32, %c0_i32_0, %c0_i32_1 : i32, i32, i32, i32
  }
}

</mosaic_0001>

<llo_original>
// kernel: tpu_custom_call.1
$region0: #{tpu_custom_call.1}
  #allocation0 [shape = 'u32[]', space=smem, size = 0x4, offset = 0x4, fixed_abs, tag = 'smem constant byte address 0x4 - core index']
  #allocation1 [shape = 'u32[144,128]{1,0:T(1,128)}', space=vmem, size = 0x12000, scoped, tag = 'internal scratch']
  %s0 = inlined_call_operand.vmem [shape: f32[2,9,9,16], index: 0, kind: input, shape index: {}]
  %s1 = inlined_call_operand.vmem [shape: f32[4,16,128], index: 1, kind: input, shape index: {}]
  %s2 = inlined_call_operand.vmem [shape: f32[1,128], index: 2, kind: input, shape index: {}]
  %s3 = inlined_call_operand.hbm [shape: f32[2,8,8,128], index: 3, kind: output, shape index: {}]
  %s4 = sld [smem:[#allocation0]]
  $region45: #{tpu_custom_call.1} parent=0
    _
  %s6 = ssub.s32 1, %s4
  %s7 = scalar_select 0, %s6, %s4
  $region1: #{tpu_custom_call.1} parent=0
    #allocation2 [shape = 'u8[65536]{0}', space=vmem, size = 0x10000, scoped, tag = 'output window, operand 0']
    #allocation3 [shape = 's32[2]{0}', space=sflag, size = 0x8, scoped, tag = 'scoped memory for tpu_custom_call.1']
    %8 = vsyncpa [#allocation3], 0
    %s9 = scalar_lea.sflag [#allocation3], 1
    %10 = vsyncpa %s9, 0
    loop: start=0, step=1, limit=4
    $region2: #{tpu_custom_call.1} parent=1 // loop_pre_header
      _
    $region3: #{tpu_custom_call.1} parent=1 // loop_header
      %s12 = sphi 0, %s16
      %p13 = scmp.ge.s32.totalorder %s12, 4
      %s22 = sphi 0, %s24
      %s25 = sphi 0, %s22
      %s26 = sphi 0, %s25
      %s42 = sphi 0, %s26
      %s46 = sphi 0, %s46
      %s48 = sphi 0, %s46
      %s49 = sphi 0, %s48
      %s63 = sphi 0, %s49
      %s67 = sphi 0, %s67
      %s69 = sphi 0, %s67
      %s70 = sphi 0, %s69
      %s84 = sphi 0, %s70
      %s90 = sphi 0, %s92
      %s93 = sphi 0, %s90
      %s94 = sphi 0, %s93
      %s110 = sphi 0, %s94
    $region4: #{tpu_custom_call.1} parent=1 // loop_header_branch
      %15 = sbr.rel (%p13) target = $region8
    $region5: #{tpu_custom_call.1} parent=1 // loop_body
      %s17 = ssub.s32 %s12, 1
      %s18 = ssub.s32 %s12, 2
      %s19 = sadd.s32 %s12, 1
      %s20 = ssub.s32 %s12, %s19
      %p21 = scmp.eq.s32.totalorder %s20, 0
      %s23 = sadd.s32 %s22, 1
      %s24 = scalar_select %p21, %s22, %s23
      %p27 = pneg %p21
      %p28 = scmp.eq.s32.totalorder %s12, 1
      %p29 = por %p27, %p28
      %p30 = scmp.ne.s32.totalorder %s22, %s25
      %p31 = scmp.eq.s32.totalorder %s12, 0
      %p32 = por %p30, %p31
      %p33 = scmp.ne.s32.totalorder %s22, %s25
      %p34 = scmp.eq.s32.totalorder %s17, 1
      %p35 = por %p33, %p34
      %p36 = scmp.ne.s32.totalorder %s25, %s26
      %p37 = scmp.eq.s32.totalorder %s17, 0
      %p38 = por %p36, %p37
      %p39 = scmp.ne.s32.totalorder %s25, %s26
      %p40 = scmp.eq.s32.totalorder %s18, 1
      %p41 = por %p39, %p40
      %p43 = scmp.ne.s32.totalorder %s26, %s42
      %p44 = scmp.eq.s32.totalorder %s18, 0
      %p45 = por %p43, %p44
      %s47 = sadd.s32 %s46, 1
      %p50 = scmp.eq.s32.totalorder %s12, 1
      %p51 = scmp.ne.s32.totalorder %s46, %s48
      %p52 = scmp.eq.s32.totalorder %s12, 0
      %p53 = por %p51, %p52
      %p54 = scmp.ne.s32.totalorder %s46, %s48
      %p55 = scmp.eq.s32.totalorder %s17, 1
      %p56 = por %p54, %p55
      %p57 = scmp.ne.s32.totalorder %s48, %s49
      %p58 = scmp.eq.s32.totalorder %s17, 0
      %p59 = por %p57, %p58
      %p60 = scmp.ne.s32.totalorder %s48, %s49
      %p61 = scmp.eq.s32.totalorder %s18, 1
      %p62 = por %p60, %p61
      %p64 = scmp.ne.s32.totalorder %s49, %s63
      %p65 = scmp.eq.s32.totalorder %s18, 0
      %p66 = por %p64, %p65
      %s68 = sadd.s32 %s67, 1
      %p71 = scmp.eq.s32.totalorder %s12, 1
      %p72 = scmp.ne.s32.totalorder %s67, %s69
      %p73 = scmp.eq.s32.totalorder %s12, 0
      %p74 = por %p72, %p73
      %p75 = scmp.ne.s32.totalorder %s67, %s69
      %p76 = scmp.eq.s32.totalorder %s17, 1
      %p77 = por %p75, %p76
      %p78 = scmp.ne.s32.totalorder %s69, %s70
      %p79 = scmp.eq.s32.totalorder %s17, 0
      %p80 = por %p78, %p79
      %p81 = scmp.ne.s32.totalorder %s69, %s70
      %p82 = scmp.eq.s32.totalorder %s18, 1
      %p83 = por %p81, %p82
      %p85 = scmp.ne.s32.totalorder %s70, %s84
      %p86 = scmp.eq.s32.totalorder %s18, 0
      %p87 = por %p85, %p86
      %s88 = ssub.s32 %s12, %s19
      %p89 = scmp.eq.s32.totalorder %s88, 0
      %s91 = sadd.s32 %s90, 1
      %s92 = scalar_select %p89, %s90, %s91
      %p95 = pneg %p89
      %p96 = scmp.eq.s32.totalorder %s12, 1
      %p97 = por %p95, %p96
      %p98 = scmp.ne.s32.totalorder %s90, %s93
      %p99 = scmp.eq.s32.totalorder %s12, 0
      %p100 = por %p98, %p99
      %p101 = scmp.ne.s32.totalorder %s90, %s93
      %p102 = scmp.eq.s32.totalorder %s17, 1
      %p103 = por %p101, %p102
      %p104 = scmp.ne.s32.totalorder %s93, %s94
      %p105 = scmp.eq.s32.totalorder %s17, 0
      %p106 = por %p104, %p105
      %p107 = scmp.ne.s32.totalorder %s93, %s94
      %p108 = scmp.eq.s32.totalorder %s18, 1
      %p109 = por %p107, %p108
      %p111 = scmp.ne.s32.totalorder %s94, %s110
      %p112 = scmp.eq.s32.totalorder %s18, 0
      %p113 = por %p111, %p112
      %p114 = scmp.le.s32.totalorder 1, %s12
      %p115 = scmp.lt.s32.totalorder %s12, 3
      %p116 = pnand %p114, %p115
      %p117 = pneg %p116
      // Predicated region
      $region9: #{tpu_custom_call.1} parent=5 // pred_check
        _
      $region10: #{tpu_custom_call.1} parent=5 // pred_check_branch
        %119 = sbr.rel (%p116) target = $region12
      $region11: #{tpu_custom_call.1} parent=5 // pred_region
        %s120 = ssub.s32 %s12, 1
        // Predicated region
        $region13: #{tpu_custom_call.1} parent=11 // pred_check
          %p121 = pneg %p59
        $region14: #{tpu_custom_call.1} parent=11 // pred_check_branch
          %123 = sbr.rel (%p121) target = $region16
        $region15: #{tpu_custom_call.1} parent=11 // pred_region
          _
        $region16: #{tpu_custom_call.1} parent=11 // pred_fallthru
          _
        // Predicated region
        $region17: #{tpu_custom_call.1} parent=11 // pred_check
          %p124 = pneg %p80
        $region18: #{tpu_custom_call.1} parent=11 // pred_check_branch
          %126 = sbr.rel (%p124) target = $region20
        $region19: #{tpu_custom_call.1} parent=11 // pred_region
          _
        $region20: #{tpu_custom_call.1} parent=11 // pred_fallthru
          _
      $region12: #{tpu_custom_call.1} parent=5 // pred_fallthru
        _
      %p127 = scmp.lt.s32.totalorder %s12, 2
      // Predicated region
      $region21: #{tpu_custom_call.1} parent=5 // pred_check
        %p128 = pneg %p127
      $region22: #{tpu_custom_call.1} parent=5 // pred_check_branch
        %130 = sbr.rel (%p128) target = $region24
      $region23: #{tpu_custom_call.1} parent=5 // pred_region
        // Predicated region
        $region25: #{tpu_custom_call.1} parent=23 // pred_check
          %p131 = pneg %p32
        $region26: #{tpu_custom_call.1} parent=23 // pred_check_branch
          %133 = sbr.rel (%p131) target = $region28
        $region27: #{tpu_custom_call.1} parent=23 // pred_region
          %p134 = scmp.lt.s32.totalorder %s12, 1
          %s135 = scalar_select %p134, %s12, 1
          %s136 = smul.addr %s135, 18
          %s137 = smul.addr %s136, 8
          %s138 = scalar_lea.vmem %s0, %s137
        $region28: #{tpu_custom_call.1} parent=23 // pred_fallthru
          _
      $region24: #{tpu_custom_call.1} parent=5 // pred_fallthru
        _
      %p139 = scmp.le.s32.totalorder 1, %s12
      %p140 = scmp.lt.s32.totalorder %s12, 3
      %p141 = pnand %p139, %p140
      %p142 = pneg %p141
      // Predicated region
      $region29: #{tpu_custom_call.1} parent=5 // pred_check
        _
      $region30: #{tpu_custom_call.1} parent=5 // pred_check_branch
        %144 = sbr.rel (%p141) target = $region32
      $region31: #{tpu_custom_call.1} parent=5 // pred_region
        %s145 = ssub.s32 %s12, 1
        %p146 = scmp.lt.s32.totalorder %s17, 1
        %s147 = scalar_select %p146, %s17, 1
        %s148 = smul.addr %s147, 18
        %s149 = smul.addr %s148, 8
        %s150 = scalar_lea.vmem %s0, %s149
        %p151 = pneg %p38
        %p152 = pneg %p35
        %p153 = pneg %p59
        %p154 = pneg %p56
        %p155 = pneg %p80
        %p156 = pneg %p77
        %p157 = pneg %p106
        %p158 = pneg %p103
        %s159 = sand.u32 %s93, 1
        %s160 = scalar_lea.sflag [#allocation3], %s159
        %s161 = sand.u32 %s93, 1
        %s162 = smul.addr %s161, 64
        %s163 = scalar_lea.vmem [#allocation2], %s162
        %p164 = scmp.lt.s32.totalorder %s17, 1
        %s165 = scalar_select %p164, %s17, 1
        %s166 = smul.addr %s165, 18
        %s167 = smul.addr %s166, 8
        %s168 = scalar_lea.vmem %s0, %s167
        %v169 = vld [vmem:[%s168] sm:$0xff]
        %v170 = vld [vmem:[%s168 + $0x10] sm:$0xff]
        %v171 = vld [vmem:[%s168 + $0x20] sm:$0xff]
        %v172 = vld [vmem:[%s168 + $0x30] sm:$0xff]
        %v173 = vld [vmem:[%s168 + $0x40] sm:$0xff]
        %v174 = vld [vmem:[%s168 + $0x50] sm:$0xff]
        %v175 = vld [vmem:[%s168 + $0x60] sm:$0xff]
        %v176 = vld [vmem:[%s168 + $0x70] sm:$0xff]
        %v177 = vld [vmem:[%s1] sm:$0xff]
        %v178 = vld [vmem:[%s1 + $0x8] sm:$0xff]
        %v179 = vld [vmem:[%s168 + $0x1] sm:$0xff]
        %v180 = vld [vmem:[%s168 + $0x11] sm:$0xff]
        %v181 = vld [vmem:[%s168 + $0x21] sm:$0xff]
        %v182 = vld [vmem:[%s168 + $0x31] sm:$0xff]
        %v183 = vld [vmem:[%s168 + $0x41] sm:$0xff]
        %v184 = vld [vmem:[%s168 + $0x51] sm:$0xff]
        %v185 = vld [vmem:[%s168 + $0x61] sm:$0xff]
        %v186 = vld [vmem:[%s168 + $0x71] sm:$0xff]
        %s187 = scalar_lea.vmem %s1, 16
        %v188 = vld [vmem:[%s187] sm:$0xff]
        %v189 = vld [vmem:[%s187 + $0x8] sm:$0xff]
        %vm190 = vcmask 130048
        %v192 = vsel %vm190, %v179, 0
        %v195 = vsel %vm190, %v180, 0
        %v198 = vsel %vm190, %v181, 0
        %v201 = vsel %vm190, %v182, 0
        %v204 = vsel %vm190, %v183, 0
        %v207 = vsel %vm190, %v184, 0
        %v210 = vsel %vm190, %v185, 0
        %v213 = vsel %vm190, %v186, 0
        %215 = vmatprep.subr.mxu0 0.0
        %216 = vmatpush1.msra.mxu0 %v188
        %217 = vmatprep.subr.mxu0 0.0
        %218 = vmatpush1.msra.mxu0 %v189
        %219 = vmatprep.subr.mxu0 0.0
        %220 = vmatpush1.msra.mxu0 0.0
        %221 = vmatprep.subr.mxu0 0.0
        %222 = vmatpush1.msra.mxu0 0.0
        %223 = vmatprep.subr.mxu0 0.0
        %224 = vmatpush1.msra.mxu0 0.0
        %225 = vmatprep.subr.mxu0 0.0
        %226 = vmatpush1.msra.mxu0 0.0
        %227 = vmatprep.subr.mxu0 0.0
        %228 = vmatpush1.msra.mxu0 0.0
        %229 = vmatprep.subr.mxu0 0.0
        %230 = vmatpush1.msra.mxu0 0.0
        %231 = vmatprep.subr.mxu0 0.0
        %232 = vmatpush1.msra.mxu0 0.0
        %233 = vmatprep.subr.mxu0 0.0
        %234 = vmatpush1.msra.mxu0 0.0
        %235 = vmatprep.subr.mxu0 0.0
        %236 = vmatpush1.msra.mxu0 0.0
        %237 = vmatprep.subr.mxu0 0.0
        %238 = vmatpush1.msra.mxu0 0.0
        %239 = vmatprep.subr.mxu0 0.0
        %240 = vmatpush1.msra.mxu0 0.0
        %241 = vmatprep.subr.mxu0 0.0
        %242 = vmatpush1.msra.mxu0 0.0
        %243 = vmatprep.subr.mxu0 0.0
        %244 = vmatpush1.msra.mxu0 0.0
        %245 = vmatprep.subr.mxu0 0.0
        %246 = vmatpush1.msra.mxu0 0.0
        %247 = vmatprep.subr.mxu0 0.0
        %248 = vmatpush1.msra.mxu0 0.0
        %249 = vmatprep.subr.mxu0 0.0
        %250 = vmatpush1.msra.mxu0 0.0
        %251 = vmatprep.subr.mxu0 0.0
        %252 = vmatpush1.msra.mxu0 0.0
        %253 = vmatprep.subr.mxu0 0.0
        %254 = vmatpush1.msra.mxu0 0.0
        %255 = vmatprep.subr.mxu0 0.0
        %256 = vmatpush1.msra.mxu0 0.0
        %257 = vmatprep.subr.mxu0 0.0
        %258 = vmatpush1.msra.mxu0 0.0
        %259 = vmatprep.subr.mxu0 0.0
        %260 = vmatpush1.msra.mxu0 0.0
        %261 = vmatprep.subr.mxu0 0.0
        %262 = vmatpush1.msra.mxu0 0.0
        %263 = vmatprep.subr.mxu0 0.0
        %264 = vmatpush1.msra.mxu0 0.0
        %265 = vmatprep.subr.mxu0 0.0
        %266 = vmatpush1.msra.mxu0 0.0
        %267 = vmatprep.subr.mxu0 0.0
        %268 = vmatpush1.msra.mxu0 0.0
        %269 = vmatprep.subr.mxu0 0.0
        %270 = vmatpush1.msra.mxu0 0.0
        %271 = vmatprep.subr.mxu0 0.0
        %272 = vmatpush1.msra.mxu0 0.0
        %273 = vmatprep.subr.mxu0 0.0
        %274 = vmatpush1.msra.mxu0 0.0
        %275 = vmatprep.subr.mxu0 0.0
        %276 = vmatpush1.msra.mxu0 0.0
        %277 = vmatprep.subr.mxu0 0.0
        %278 = vmatpush1.msra.mxu0 0.0
        %279 = vmatprep.mubr.f32.mxu0 0.0
        %280 = vmatmul.mubr.f32.gmra.mrb[0].mxu0 %v192
        %v281 = vpop.f32.mrb[0].mxu0
        %v282 = vadd.f32 0.0, %v281
        %v283 = vpop.f32.mrb[0].mxu0
        %284 = vmatprep.mubr.f32.mxu0 0.0
        %285 = vmatmul.mubr.f32.gmra.mrb[0].mxu0 %v195
        %v286 = vpop.f32.mrb[0].mxu0
        %v287 = vadd.f32 0.0, %v286
        %v288 = vpop.f32.mrb[0].mxu0
        %289 = vmatprep.mubr.f32.mxu0 0.0
        %290 = vmatmul.mubr.f32.gmra.mrb[0].mxu0 %v198
        %v291 = vpop.f32.mrb[0].mxu0
        %v292 = vadd.f32 0.0, %v291
        %v293 = vpop.f32.mrb[0].mxu0
        %294 = vmatprep.mubr.f32.mxu0 0.0
        %295 = vmatmul.mubr.f32.gmra.mrb[0].mxu0 %v201
        %v296 = vpop.f32.mrb[0].mxu0
        %v297 = vadd.f32 0.0, %v296
        %v298 = vpop.f32.mrb[0].mxu0
        %299 = vmatprep.mubr.f32.mxu0 0.0
        %300 = vmatmul.mubr.f32.gmra.mrb[0].mxu0 %v204
        %v301 = vpop.f32.mrb[0].mxu0
        %v302 = vadd.f32 0.0, %v301
        %v303 = vpop.f32.mrb[0].mxu0
        %304 = vmatprep.mubr.f32.mxu0 0.0
        %305 = vmatmul.mubr.f32.gmra.mrb[0].mxu0 %v207
        %v306 = vpop.f32.mrb[0].mxu0
        %v307 = vadd.f32 0.0, %v306
        %v308 = vpop.f32.mrb[0].mxu0
        %309 = vmatprep.mubr.f32.mxu0 0.0
        %310 = vmatmul.mubr.f32.gmra.mrb[0].mxu0 %v210
        %v311 = vpop.f32.mrb[0].mxu0
        %v312 = vadd.f32 0.0, %v311
        %v313 = vpop.f32.mrb[0].mxu0
        %314 = vmatprep.mubr.f32.mxu0 0.0
        %315 = vmatmul.mubr.f32.gmra.mrb[0].mxu0 %v213
        %v316 = vpop.f32.mrb[0].mxu0
        %v317 = vadd.f32 0.0, %v316
        %v318 = vpop.f32.mrb[0].mxu0
        %319 = vdwg.mxu0
        %v321 = vsel %vm190, %v169, 0
        %v324 = vsel %vm190, %v170, 0
        %v327 = vsel %vm190, %v171, 0
        %v330 = vsel %vm190, %v172, 0
        %v333 = vsel %vm190, %v173, 0
        %v336 = vsel %vm190, %v174, 0
        %v339 = vsel %vm190, %v175, 0
        %v342 = vsel %vm190, %v176, 0
        %344 = vmatprep.subr.mxu0 0.0
        %345 = vmatpush1.msra.mxu0 %v177
        %346 = vmatprep.subr.mxu0 0.0
        %347 = vmatpush1.msra.mxu0 %v178
        %348 = vmatprep.subr.mxu0 0.0
        %349 = vmatpush1.msra.mxu0 0.0
        %350 = vmatprep.subr.mxu0 0.0
        %351 = vmatpush1.msra.mxu0 0.0
        %352 = vmatprep.subr.mxu0 0.0
        %353 = vmatpush1.msra.mxu0 0.0
        %354 = vmatprep.subr.mxu0 0.0
        %355 = vmatpush1.msra.mxu0 0.0
        %356 = vmatprep.subr.mxu0 0.0
        %357 = vmatpush1.msra.mxu0 0.0
        %358 = vmatprep.subr.mxu0 0.0
        %359 = vmatpush1.msra.mxu0 0.0
        %360 = vmatprep.subr.mxu0 0.0
        %361 = vmatpush1.msra.mxu0 0.0
        %362 = vmatprep.subr.mxu0 0.0
        %363 = vmatpush1.msra.mxu0 0.0
        %364 = vmatprep.subr.mxu0 0.0
        %365 = vmatpush1.msra.mxu0 0.0
        %366 = vmatprep.subr.mxu0 0.0
        %367 = vmatpush1.msra.mxu0 0.0
        %368 = vmatprep.subr.mxu0 0.0
        %369 = vmatpush1.msra.mxu0 0.0
        %370 = vmatprep.subr.mxu0 0.0
        %371 = vmatpush1.msra.mxu0 0.0
        %372 = vmatprep.subr.mxu0 0.0
        %373 = vmatpush1.msra.mxu0 0.0
        %374 = vmatprep.subr.mxu0 0.0
        %375 = vmatpush1.msra.mxu0 0.0
        %376 = vmatprep.subr.mxu0 0.0
        %377 = vmatpush1.msra.mxu0 0.0
        %378 = vmatprep.subr.mxu0 0.0
        %379 = vmatpush1.msra.mxu0 0.0
        %380 = vmatprep.subr.mxu0 0.0
        %381 = vmatpush1.msra.mxu0 0.0
        %382 = vmatprep.subr.mxu0 0.0
        %383 = vmatpush1.msra.mxu0 0.0
        %384 = vmatprep.subr.mxu0 0.0
        %385 = vmatpush1.msra.mxu0 0.0
        %386 = vmatprep.subr.mxu0 0.0
        %387 = vmatpush1.msra.mxu0 0.0
        %388 = vmatprep.subr.mxu0 0.0
        %389 = vmatpush1.msra.mxu0 0.0
        %390 = vmatprep.subr.mxu0 0.0
        %391 = vmatpush1.msra.mxu0 0.0
        %392 = vmatprep.subr.mxu0 0.0
        %393 = vmatpush1.msra.mxu0 0.0
        %394 = vmatprep.subr.mxu0 0.0
        %395 = vmatpush1.msra.mxu0 0.0
        %396 = vmatprep.subr.mxu0 0.0
        %397 = vmatpush1.msra.mxu0 0.0
        %398 = vmatprep.subr.mxu0 0.0
        %399 = vmatpush1.msra.mxu0 0.0
        %400 = vmatprep.subr.mxu0 0.0
        %401 = vmatpush1.msra.mxu0 0.0
        %402 = vmatprep.subr.mxu0 0.0
        %403 = vmatpush1.msra.mxu0 0.0
        %404 = vmatprep.subr.mxu0 0.0
        %405 = vmatpush1.msra.mxu0 0.0
        %406 = vmatprep.subr.mxu0 0.0
        %407 = vmatpush1.msra.mxu0 0.0
        %408 = vmatprep.mubr.f32.mxu0 0.0
        %409 = vmatmul.mubr.f32.gmra.mrb[0].mxu0 %v321
        %v410 = vpop.f32.mrb[0].mxu0
        %v411 = vadd.f32 %v282, %v410
        %v412 = vpop.f32.mrb[0].mxu0
        %413 = vmatprep.mubr.f32.mxu0 0.0
        %414 = vmatmul.mubr.f32.gmra.mrb[0].mxu0 %v324
        %v415 = vpop.f32.mrb[0].mxu0
        %v416 = vadd.f32 %v287, %v415
        %v417 = vpop.f32.mrb[0].mxu0
        %418 = vmatprep.mubr.f32.mxu0 0.0
        %419 = vmatmul.mubr.f32.gmra.mrb[0].mxu0 %v327
        %v420 = vpop.f32.mrb[0].mxu0
        %v421 = vadd.f32 %v292, %v420
        %v422 = vpop.f32.mrb[0].mxu0
        %423 = vmatprep.mubr.f32.mxu0 0.0
        %424 = vmatmul.mubr.f32.gmra.mrb[0].mxu0 %v330
        %v425 = vpop.f32.mrb[0].mxu0
        %v426 = vadd.f32 %v297, %v425
        %v427 = vpop.f32.mrb[0].mxu0
        %428 = vmatprep.mubr.f32.mxu0 0.0
        %429 = vmatmul.mubr.f32.gmra.mrb[0].mxu0 %v333
        %v430 = vpop.f32.mrb[0].mxu0
        %v431 = vadd.f32 %v302, %v430
        %v432 = vpop.f32.mrb[0].mxu0
        %433 = vmatprep.mubr.f32.mxu0 0.0
        %434 = vmatmul.mubr.f32.gmra.mrb[0].mxu0 %v336
        %v435 = vpop.f32.mrb[0].mxu0
        %v436 = vadd.f32 %v307, %v435
        %v437 = vpop.f32.mrb[0].mxu0
        %438 = vmatprep.mubr.f32.mxu0 0.0
        %439 = vmatmul.mubr.f32.gmra.mrb[0].mxu0 %v339
        %v440 = vpop.f32.mrb[0].mxu0
        %v441 = vadd.f32 %v312, %v440
        %v442 = vpop.f32.mrb[0].mxu0
        %443 = vmatprep.mubr.f32.mxu0 0.0
        %444 = vmatmul.mubr.f32.gmra.mrb[0].mxu0 %v342
        %v445 = vpop.f32.mrb[0].mxu0
        %v446 = vadd.f32 %v317, %v445
        %v447 = vpop.f32.mrb[0].mxu0
        %448 = vdwg.mxu0
        %s449 = scalar_lea.vmem %s168, 16
        %v450 = vld [vmem:[%s449] sm:$0xff]
        %v451 = vld [vmem:[%s449 + $0x10] sm:$0xff]
        %v452 = vld [vmem:[%s449 + $0x20] sm:$0xff]
        %v453 = vld [vmem:[%s449 + $0x30] sm:$0xff]
        %v454 = vld [vmem:[%s449 + $0x40] sm:$0xff]
        %v455 = vld [vmem:[%s449 + $0x50] sm:$0xff]
        %v456 = vld [vmem:[%s449 + $0x60] sm:$0xff]
        %v457 = vld [vmem:[%s449 + $0x70] sm:$0xff]
        %s458 = scalar_lea.vmem %s1, 32
        %v459 = vld [vmem:[%s458] sm:$0xff]
        %v460 = vld [vmem:[%s458 + $0x8] sm:$0xff]
        %v462 = vsel %vm190, %v450, 0
        %v465 = vsel %vm190, %v451, 0
        %v468 = vsel %vm190, %v452, 0
        %v471 = vsel %vm190, %v453, 0
        %v474 = vsel %vm190, %v454, 0
        %v477 = vsel %vm190, %v455, 0
        %v480 = vsel %vm190, %v456, 0
        %v483 = vsel %vm190, %v457, 0
        %485 = vmatprep.subr.mxu0 0.0
        %486 = vmatpush1.msra.mxu0 %v459
        %487 = vmatprep.subr.mxu0 0.0
        %488 = vmatpush1.msra.mxu0 %v460
        %489 = vmatprep.subr.mxu0 0.0
        %490 = vmatpush1.msra.mxu0 0.0
        %491 = vmatprep.subr.mxu0 0.0
        %492 = vmatpush1.msra.mxu0 0.0
        %493 = vmatprep.subr.mxu0 0.0
        %494 = vmatpush1.msra.mxu0 0.0
        %495 = vmatprep.subr.mxu0 0.0
        %496 = vmatpush1.msra.mxu0 0.0
        %497 = vmatprep.subr.mxu0 0.0
        %498 = vmatpush1.msra.mxu0 0.0
        %499 = vmatprep.subr.mxu0 0.0
        %500 = vmatpush1.msra.mxu0 0.0
        %501 = vmatprep.subr.mxu0 0.0
        %502 = vmatpush1.msra.mxu0 0.0
        %503 = vmatprep.subr.mxu0 0.0
        %504 = vmatpush1.msra.mxu0 0.0
        %505 = vmatprep.subr.mxu0 0.0
        %506 = vmatpush1.msra.mxu0 0.0
        %507 = vmatprep.subr.mxu0 0.0
        %508 = vmatpush1.msra.mxu0 0.0
        %509 = vmatprep.subr.mxu0 0.0
        %510 = vmatpush1.msra.mxu0 0.0
        %511 = vmatprep.subr.mxu0 0.0
        %512 = vmatpush1.msra.mxu0 0.0
        %513 = vmatprep.subr.mxu0 0.0
        %514 = vmatpush1.msra.mxu0 0.0
        %515 = vmatprep.subr.mxu0 0.0
        %516 = vmatpush1.msra.mxu0 0.0
        %517 = vmatprep.subr.mxu0 0.0
        %518 = vmatpush1.msra.mxu0 0.0
        %519 = vmatprep.subr.mxu0 0.0
        %520 = vmatpush1.msra.mxu0 0.0
        %521 = vmatprep.subr.mxu0 0.0
        %522 = vmatpush1.msra.mxu0 0.0
        %523 = vmatprep.subr.mxu0 0.0
        %524 = vmatpush1.msra.mxu0 0.0
        %525 = vmatprep.subr.mxu0 0.0
        %526 = vmatpush1.msra.mxu0 0.0
        %527 = vmatprep.subr.mxu0 0.0
        %528 = vmatpush1.msra.mxu0 0.0
        %529 = vmatprep.subr.mxu0 0.0
        %530 = vmatpush1.msra.mxu0 0.0
        %531 = vmatprep.subr.mxu0 0.0
        %532 = vmatpush1.msra.mxu0 0.0
        %533 = vmatprep.subr.mxu0 0.0
        %534 = vmatpush1.msra.mxu0 0.0
        %535 = vmatprep.subr.mxu0 0.0
        %536 = vmatpush1.msra.mxu0 0.0
        %537 = vmatprep.subr.mxu0 0.0
        %538 = vmatpush1.msra.mxu0 0.0
        %539 = vmatprep.subr.mxu0 0.0
        %540 = vmatpush1.msra.mxu0 0.0
        %541 = vmatprep.subr.mxu0 0.0
        %542 = vmatpush1.msra.mxu0 0.0
        %543 = vmatprep.subr.mxu0 0.0
        %544 = vmatpush1.msra.mxu0 0.0
        %545 = vmatprep.subr.mxu0 0.0
        %546 = vmatpush1.msra.mxu0 0.0
        %547 = vmatprep.subr.mxu0 0.0
        %548 = vmatpush1.msra.mxu0 0.0
        %549 = vmatprep.mubr.f32.mxu0 0.0
        %550 = vmatmul.mubr.f32.gmra.mrb[0].mxu0 %v462
        %v551 = vpop.f32.mrb[0].mxu0
        %v552 = vadd.f32 0.0, %v551
        %v553 = vpop.f32.mrb[0].mxu0
        %554 = vmatprep.mubr.f32.mxu0 0.0
        %555 = vmatmul.mubr.f32.gmra.mrb[0].mxu0 %v465
        %v556 = vpop.f32.mrb[0].mxu0
        %v557 = vadd.f32 0.0, %v556
        %v558 = vpop.f32.mrb[0].mxu0
        %559 = vmatprep.mubr.f32.mxu0 0.0
        %560 = vmatmul.mubr.f32.gmra.mrb[0].mxu0 %v468
        %v561 = vpop.f32.mrb[0].mxu0
        %v562 = vadd.f32 0.0, %v561
        %v563 = vpop.f32.mrb[0].mxu0
        %564 = vmatprep.mubr.f32.mxu0 0.0
        %565 = vmatmul.mubr.f32.gmra.mrb[0].mxu0 %v471
        %v566 = vpop.f32.mrb[0].mxu0
        %v567 = vadd.f32 0.0, %v566
        %v568 = vpop.f32.mrb[0].mxu0
        %569 = vmatprep.mubr.f32.mxu0 0.0
        %570 = vmatmul.mubr.f32.gmra.mrb[0].mxu0 %v474
        %v571 = vpop.f32.mrb[0].mxu0
        %v572 = vadd.f32 0.0, %v571
        %v573 = vpop.f32.mrb[0].mxu0
        %574 = vmatprep.mubr.f32.mxu0 0.0
        %575 = vmatmul.mubr.f32.gmra.mrb[0].mxu0 %v477
        %v576 = vpop.f32.mrb[0].mxu0
        %v577 = vadd.f32 0.0, %v576
        %v578 = vpop.f32.mrb[0].mxu0
        %579 = vmatprep.mubr.f32.mxu0 0.0
        %580 = vmatmul.mubr.f32.gmra.mrb[0].mxu0 %v480
        %v581 = vpop.f32.mrb[0].mxu0
        %v582 = vadd.f32 0.0, %v581
        %v583 = vpop.f32.mrb[0].mxu0
        %584 = vmatprep.mubr.f32.mxu0 0.0
        %585 = vmatmul.mubr.f32.gmra.mrb[0].mxu0 %v483
        %v586 = vpop.f32.mrb[0].mxu0
        %v587 = vadd.f32 0.0, %v586
        %v588 = vpop.f32.mrb[0].mxu0
        %589 = vdwg.mxu0
        %v590 = vadd.f32 %v411, %v552
        %v591 = vadd.f32 %v416, %v557
        %v592 = vadd.f32 %v421, %v562
        %v593 = vadd.f32 %v426, %v567
        %v594 = vadd.f32 %v431, %v572
        %v595 = vadd.f32 %v436, %v577
        %v596 = vadd.f32 %v441, %v582
        %v597 = vadd.f32 %v446, %v587
        %v598 = vld [vmem:[%s449 + $0x1] sm:$0xff]
        %v599 = vld [vmem:[%s449 + $0x11] sm:$0xff]
        %v600 = vld [vmem:[%s449 + $0x21] sm:$0xff]
        %v601 = vld [vmem:[%s449 + $0x31] sm:$0xff]
        %v602 = vld [vmem:[%s449 + $0x41] sm:$0xff]
        %v603 = vld [vmem:[%s449 + $0x51] sm:$0xff]
        %v604 = vld [vmem:[%s449 + $0x61] sm:$0xff]
        %v605 = vld [vmem:[%s449 + $0x71] sm:$0xff]
        %s606 = scalar_lea.vmem %s1, 48
        %v607 = vld [vmem:[%s606] sm:$0xff]
        %v608 = vld [vmem:[%s606 + $0x8] sm:$0xff]
        %v610 = vsel %vm190, %v598, 0
        %v613 = vsel %vm190, %v599, 0
        %v616 = vsel %vm190, %v600, 0
        %v619 = vsel %vm190, %v601, 0
        %v622 = vsel %vm190, %v602, 0
        %v625 = vsel %vm190, %v603, 0
        %v628 = vsel %vm190, %v604, 0
        %v631 = vsel %vm190, %v605, 0
        %633 = vmatprep.subr.mxu0 0.0
        %634 = vmatpush1.msra.mxu0 %v607
        %635 = vmatprep.subr.mxu0 0.0
        %636 = vmatpush1.msra.mxu0 %v608
        %637 = vmatprep.subr.mxu0 0.0
        %638 = vmatpush1.msra.mxu0 0.0
        %639 = vmatprep.subr.mxu0 0.0
        %640 = vmatpush1.msra.mxu0 0.0
        %641 = vmatprep.subr.mxu0 0.0
        %642 = vmatpush1.msra.mxu0 0.0
        %643 = vmatprep.subr.mxu0 0.0
        %644 = vmatpush1.msra.mxu0 0.0
        %645 = vmatprep.subr.mxu0 0.0
        %646 = vmatpush1.msra.mxu0 0.0
        %647 = vmatprep.subr.mxu0 0.0
        %648 = vmatpush1.msra.mxu0 0.0
        %649 = vmatprep.subr.mxu0 0.0
        %650 = vmatpush1.msra.mxu0 0.0
        %651 = vmatprep.subr.mxu0 0.0
        %652 = vmatpush1.msra.mxu0 0.0
        %653 = vmatprep.subr.mxu0 0.0
        %654 = vmatpush1.msra.mxu0 0.0
        %655 = vmatprep.subr.mxu0 0.0
        %656 = vmatpush1.msra.mxu0 0.0
        %657 = vmatprep.subr.mxu0 0.0
        %658 = vmatpush1.msra.mxu0 0.0
        %659 = vmatprep.subr.mxu0 0.0
        %660 = vmatpush1.msra.mxu0 0.0
        %661 = vmatprep.subr.mxu0 0.0
        %662 = vmatpush1.msra.mxu0 0.0
        %663 = vmatprep.subr.mxu0 0.0
        %664 = vmatpush1.msra.mxu0 0.0
        %665 = vmatprep.subr.mxu0 0.0
        %666 = vmatpush1.msra.mxu0 0.0
        %667 = vmatprep.subr.mxu0 0.0
        %668 = vmatpush1.msra.mxu0 0.0
        %669 = vmatprep.subr.mxu0 0.0
        %670 = vmatpush1.msra.mxu0 0.0
        %671 = vmatprep.subr.mxu0 0.0
        %672 = vmatpush1.msra.mxu0 0.0
        %673 = vmatprep.subr.mxu0 0.0
        %674 = vmatpush1.msra.mxu0 0.0
        %675 = vmatprep.subr.mxu0 0.0
        %676 = vmatpush1.msra.mxu0 0.0
        %677 = vmatprep.subr.mxu0 0.0
        %678 = vmatpush1.msra.mxu0 0.0
        %679 = vmatprep.subr.mxu0 0.0
        %680 = vmatpush1.msra.mxu0 0.0
        %681 = vmatprep.subr.mxu0 0.0
        %682 = vmatpush1.msra.mxu0 0.0
        %683 = vmatprep.subr.mxu0 0.0
        %684 = vmatpush1.msra.mxu0 0.0
        %685 = vmatprep.subr.mxu0 0.0
        %686 = vmatpush1.msra.mxu0 0.0
        %687 = vmatprep.subr.mxu0 0.0
        %688 = vmatpush1.msra.mxu0 0.0
        %689 = vmatprep.subr.mxu0 0.0
        %690 = vmatpush1.msra.mxu0 0.0
        %691 = vmatprep.subr.mxu0 0.0
        %692 = vmatpush1.msra.mxu0 0.0
        %693 = vmatprep.subr.mxu0 0.0
        %694 = vmatpush1.msra.mxu0 0.0
        %695 = vmatprep.subr.mxu0 0.0
        %696 = vmatpush1.msra.mxu0 0.0
        %697 = vmatprep.mubr.f32.mxu0 0.0
        %698 = vmatmul.mubr.f32.gmra.mrb[0].mxu0 %v610
        %v699 = vpop.f32.mrb[0].mxu0
        %v700 = vadd.f32 0.0, %v699
        %v701 = vpop.f32.mrb[0].mxu0
        %702 = vmatprep.mubr.f32.mxu0 0.0
        %703 = vmatmul.mubr.f32.gmra.mrb[0].mxu0 %v613
        %v704 = vpop.f32.mrb[0].mxu0
        %v705 = vadd.f32 0.0, %v704
        %v706 = vpop.f32.mrb[0].mxu0
        %707 = vmatprep.mubr.f32.mxu0 0.0
        %708 = vmatmul.mubr.f32.gmra.mrb[0].mxu0 %v616
        %v709 = vpop.f32.mrb[0].mxu0
        %v710 = vadd.f32 0.0, %v709
        %v711 = vpop.f32.mrb[0].mxu0
        %712 = vmatprep.mubr.f32.mxu0 0.0
        %713 = vmatmul.mubr.f32.gmra.mrb[0].mxu0 %v619
        %v714 = vpop.f32.mrb[0].mxu0
        %v715 = vadd.f32 0.0, %v714
        %v716 = vpop.f32.mrb[0].mxu0
        %717 = vmatprep.mubr.f32.mxu0 0.0
        %718 = vmatmul.mubr.f32.gmra.mrb[0].mxu0 %v622
        %v719 = vpop.f32.mrb[0].mxu0
        %v720 = vadd.f32 0.0, %v719
        %v721 = vpop.f32.mrb[0].mxu0
        %722 = vmatprep.mubr.f32.mxu0 0.0
        %723 = vmatmul.mubr.f32.gmra.mrb[0].mxu0 %v625
        %v724 = vpop.f32.mrb[0].mxu0
        %v725 = vadd.f32 0.0, %v724
        %v726 = vpop.f32.mrb[0].mxu0
        %727 = vmatprep.mubr.f32.mxu0 0.0
        %728 = vmatmul.mubr.f32.gmra.mrb[0].mxu0 %v628
        %v729 = vpop.f32.mrb[0].mxu0
        %v730 = vadd.f32 0.0, %v729
        %v731 = vpop.f32.mrb[0].mxu0
        %732 = vmatprep.mubr.f32.mxu0 0.0
        %733 = vmatmul.mubr.f32.gmra.mrb[0].mxu0 %v631
        %v734 = vpop.f32.mrb[0].mxu0
        %v735 = vadd.f32 0.0, %v734
        %v736 = vpop.f32.mrb[0].mxu0
        %737 = vdwg.mxu0
        %v738 = vadd.f32 %v590, %v700
        %v739 = vadd.f32 %v591, %v705
        %v740 = vadd.f32 %v592, %v710
        %v741 = vadd.f32 %v593, %v715
        %v742 = vadd.f32 %v594, %v720
        %v743 = vadd.f32 %v595, %v725
        %v744 = vadd.f32 %v596, %v730
        %v745 = vadd.f32 %v597, %v735
        %v746 = vld [vmem:[%s2] sm:$0x1]
        %v748 = vlaneseq
        %v749 = vshrl.u32 %v748, 7
        %v750 = vsub.s32 0, %v749
        %v751 = vrot.slane %v746, %v750
        %v753 = vadd.f32 %v738, %v751
        %v754 = vadd.f32 %v739, %v751
        %v755 = vadd.f32 %v740, %v751
        %v756 = vadd.f32 %v741, %v751
        %v757 = vadd.f32 %v742, %v751
        %v758 = vadd.f32 %v743, %v751
        %v759 = vadd.f32 %v744, %v751
        %v760 = vadd.f32 %v745, %v751
        %v761 = vmax.f32 %v753, 0.0
        %v762 = vmax.f32 %v754, 0.0
        %v763 = vmax.f32 %v755, 0.0
        %v764 = vmax.f32 %v756, 0.0
        %v765 = vmax.f32 %v757, 0.0
        %v766 = vmax.f32 %v758, 0.0
        %v767 = vmax.f32 %v759, 0.0
        %v768 = vmax.f32 %v760, 0.0
        %769 = vst [vmem:[%s163] sm:$0xff] %v761
        %770 = vst [vmem:[%s163 + $0x8] sm:$0xff] %v762
        %771 = vst [vmem:[%s163 + $0x10] sm:$0xff] %v763
        %772 = vst [vmem:[%s163 + $0x18] sm:$0xff] %v764
        %773 = vst [vmem:[%s163 + $0x20] sm:$0xff] %v765
        %774 = vst [vmem:[%s163 + $0x28] sm:$0xff] %v766
        %775 = vst [vmem:[%s163 + $0x30] sm:$0xff] %v767
        %776 = vst [vmem:[%s163 + $0x38] sm:$0xff] %v768
        %s777 = sand.u32 %s93, 1
        %s778 = scalar_lea.sflag [#allocation3], %s777
        %s779 = sand.u32 %s93, 1
        %s780 = smul.addr %s779, 64
        %s781 = scalar_lea.vmem [#allocation2], %s780
        // Predicated region
        $region33: #{tpu_custom_call.1} parent=31 // pred_check
          %p782 = pneg %p103
        $region34: #{tpu_custom_call.1} parent=31 // pred_check_branch
          %784 = sbr.rel (%p782) target = $region36
        $region35: #{tpu_custom_call.1} parent=31 // pred_region
          %s786 = ssub.s32 1024, 1024
          %787 = vsyncadd %s778, %s786
          %s788 = smul.addr %s17, 8
          %s789 = smul.addr %s788, 128
          %s790 = scalar_lea.hbm %s3, %s789
          %s791 = sshll.u32 %s781, 4
          %s792 = int_to_ptr.vmem [resolvable:$true] %s791
          %797 = dma.vmem_to_hbm [thread:$0]  %s792, 1024, %s790, %s778, 128, 128, 8
        $region36: #{tpu_custom_call.1} parent=31 // pred_fallthru
          _
      $region32: #{tpu_custom_call.1} parent=5 // pred_fallthru
        _
      %p798 = scmp.le.s32.totalorder 2, %s12
      // Predicated region
      $region37: #{tpu_custom_call.1} parent=5 // pred_check
        %p799 = pneg %p798
      $region38: #{tpu_custom_call.1} parent=5 // pred_check_branch
        %801 = sbr.rel (%p799) target = $region40
      $region39: #{tpu_custom_call.1} parent=5 // pred_region
        %s802 = ssub.s32 %s12, 2
        // Predicated region
        $region41: #{tpu_custom_call.1} parent=39 // pred_check
          %p803 = pneg %p109
        $region42: #{tpu_custom_call.1} parent=39 // pred_check_branch
          %805 = sbr.rel (%p803) target = $region44
        $region43: #{tpu_custom_call.1} parent=39 // pred_region
          %s806 = sand.u32 %s94, 1
          %s807 = scalar_lea.sflag [#allocation3], %s806
          %s808 = sand.u32 %s94, 1
          %s809 = smul.addr %s808, 64
          %s810 = scalar_lea.vmem [#allocation2], %s809
          %811 = dma.done %s807, 1024
        $region44: #{tpu_custom_call.1} parent=39 // pred_fallthru
          _
      $region40: #{tpu_custom_call.1} parent=5 // pred_fallthru
        _
    $region6: #{tpu_custom_call.1} parent=1 // loop_footer
      %s16 = sadd.s32 1, %s12
    $region7: #{tpu_custom_call.1} parent=1 // loop_footer_branch
      %11 = sbr.rel target = $region3
    $region8: #{tpu_custom_call.1} parent=1 // loop_exit
      _
    %812 = vsyncpa [#allocation3], 1
    %s813 = scalar_lea.sflag [#allocation3], 1
    %814 = vsyncpa %s813, 1

</llo_original>
